<compile_context>
chip_gen: v5e
topology: v5e:2x2
jax: 0.10.0
libtpu: 0.0.40
codegen_flags: <defaults>
</compile_context>

<pallas_src>
import jax
import jax.numpy as jnp
from jax.experimental import pallas as pl
from jax.experimental.pallas import tpu as pltpu

_TARGET_BLOCK_BYTES = 4 * 1024 * 1024   # ~4 MiB per block buffer
_VMEM_LIMIT_BYTES = 48 * 1024 * 1024    # < v7x's 64 MiB physical VMEM
_LANE = 128


def _mish_kernel(x_ref, o_ref):
    x = x_ref[...].astype(jnp.float32)
    # Numerically-stable Mish matching PyTorch (F.softplus threshold=20):
    #   tanh(softplus(x)) = (t*t + 2t) / (t*t + 2t + 2),  t = exp(x)
    # exp is the only mandatory EUP transcendental; the reciprocal seed is an
    # approx EUP op and one Newton step on the VPU restores full f32 accuracy.
    t = jnp.exp(jnp.minimum(x, 20.0))
    u = t * (t + 2.0)
    d = u + 2.0
    r = pl.reciprocal(d, approx=True)
    r = r * (2.0 - d * r)              # Newton refinement (cheap VPU work)
    y = x * (u * r)
    o_ref[...] = jnp.where(x > 20.0, x, y).astype(o_ref.dtype)


def _round_up(x, m):
    return -(-x // m) * m


def _compiler_params():
    return pltpu.CompilerParams(
        dimension_semantics=("parallel",),
        vmem_limit_bytes=_VMEM_LIMIT_BYTES,
    )


def _cost(n, itemsize):
    return pl.CostEstimate(flops=10 * n, transcendentals=2 * n,
                           bytes_accessed=2 * n * itemsize)


def _choose_width(n):
    """Largest lane-dense slab width that divides n exactly (no padding)."""
    for w in (4096, 2048, 1024, 512, 256, 128):
        if n % w == 0:
            return w
    return None


def _mish_2d(flat, n, width, itemsize):
    """Aligned path: reshape (free) to a lane-dense (rows, width) slab."""
    rows = n // width
    slab = flat.reshape(rows, width)

    sublane = max(8, 32 // max(itemsize, 1))   # packed sublane tile per dtype
    target_rows = max(
        sublane,
        (_TARGET_BLOCK_BYTES // (width * itemsize)) // sublane * sublane)
    if rows >= 2 * sublane:
        # At least two grid programs so ("parallel",) shards across v7x's 2 TCs.
        block_rows = min(target_rows, _round_up(pl.cdiv(rows, 2), sublane))
    else:
        block_rows = rows

    grid = (pl.cdiv(rows, block_rows),)   # partial last block masked by Pallas
    out = pl.pallas_call(
        _mish_kernel,
        out_shape=jax.ShapeDtypeStruct(slab.shape, slab.dtype),
        grid_spec=pltpu.PrefetchScalarGridSpec(
            num_scalar_prefetch=0,
            grid=grid,
            in_specs=[pl.BlockSpec((block_rows, width), lambda i: (i, 0))],
            out_specs=pl.BlockSpec((block_rows, width), lambda i: (i, 0)),
        ),
        compiler_params=_compiler_params(),
        cost_estimate=_cost(n, itemsize),
    )(slab)
    return out.reshape(-1)


def _mish_1d(flat, n, itemsize):
    """Fallback for sizes not divisible by 128: flat 1-D grid, no pad/slice."""
    tile = 8 * _LANE                      # 1024: safe granularity for any dtype
    if n <= tile:
        block = n                         # single full-array block
    else:
        target = max(tile, (_TARGET_BLOCK_BYTES // itemsize) // tile * tile)
        block = min(target, _round_up(pl.cdiv(n, 2), tile))
    grid = (pl.cdiv(n, block),)           # partial last block masked by Pallas
    return pl.pallas_call(
        _mish_kernel,
        out_shape=jax.ShapeDtypeStruct((n,), flat.dtype),
        grid_spec=pltpu.PrefetchScalarGridSpec(
            num_scalar_prefetch=0,
            grid=grid,
            in_specs=[pl.BlockSpec((block,), lambda i: (i,))],
            out_specs=pl.BlockSpec((block,), lambda i: (i,)),
        ),
        compiler_params=_compiler_params(),
        cost_estimate=_cost(n, itemsize),
    )(flat)


def _mish_impl(x):
    orig_shape = x.shape
    n = x.size
    if n == 0:
        return x
    itemsize = jnp.dtype(x.dtype).itemsize
    flat = x.reshape(-1)                  # free for contiguous arrays
    width = _choose_width(n)
    if width is not None:
        out = _mish_2d(flat, n, width, itemsize)
    else:
        out = _mish_1d(flat, n, itemsize)
    return out.reshape(orig_shape)


mish = jax.jit(_mish_impl)


if __name__ == "__main__":
    key = jax.random.PRNGKey(0)
    x = jax.random.normal(key, (2, 4, 16, 16), dtype=jnp.float32)  # NCHW

    y = mish(x)
    jax.block_until_ready(y)

    # Plain-JAX reference: x * tanh(softplus(x)).
    ref = lambda v: v * jnp.tanh(jnp.logaddexp(v, 0.0))
    assert y.shape == x.shape and y.dtype == x.dtype
    assert jnp.allclose(y, ref(x), atol=1e-4, rtol=1e-4)

    # Also exercise the 1-D fallback path (size not divisible by 128).
    x_odd = jax.random.normal(jax.random.PRNGKey(0), (3, 5, 7), dtype=jnp.float32)
    y_odd = mish(x_odd)
    jax.block_until_ready(y_odd)
    assert jnp.allclose(y_odd, ref(x_odd), atol=1e-4, rtol=1e-4)

    print("KERNEL_OK")
</pallas_src>

<mosaic_0001>
module attributes {stable_mosaic.version = 11 : i64} {
  func.func @_mish_kernel(%arg0: i32, %arg1: memref<1x2048xf32, #tpu.memory_space<vmem>>, %arg2: memref<1x2048xf32, #tpu.memory_space<vmem>>) attributes {dimension_semantics = [#tpu.dimension_semantics<parallel>], iteration_bounds = array<i64: 1>, scalar_prefetch = 0 : i64, scratch_operands = 0 : i64, tpu.core_type = #tpu.core_type<tc>, window_params = [{transform_indices = @transform_0, window_bounds = array<i64: 1, 2048>}, {transform_indices = @transform_1, window_bounds = array<i64: 1, 2048>}]} {
    %c0 = arith.constant 0 : index
    %c0_0 = arith.constant 0 : index
    %0 = vector.load %arg1[%c0, %c0_0] : memref<1x2048xf32, #tpu.memory_space<vmem>>, vector<1x2048xf32>
    %cst = arith.constant 2.000000e+01 : f32
    %1 = vector.broadcast %cst : f32 to vector<1x2048xf32>
    %2 = arith.minimumf %0, %1 : vector<1x2048xf32>
    %3 = math.exp %2 : vector<1x2048xf32>
    %cst_1 = arith.constant 2.000000e+00 : f32
    %4 = vector.broadcast %cst_1 : f32 to vector<1x2048xf32>
    %5 = arith.addf %3, %4 : vector<1x2048xf32>
    %6 = arith.mulf %3, %5 : vector<1x2048xf32>
    %cst_2 = arith.constant 2.000000e+00 : f32
    %7 = vector.broadcast %cst_2 : f32 to vector<1x2048xf32>
    %8 = arith.addf %6, %7 : vector<1x2048xf32>
    %9 = tpu.reciprocal %8 {approx = true} : vector<1x2048xf32> -> vector<1x2048xf32>
    %10 = arith.mulf %8, %9 : vector<1x2048xf32>
    %cst_3 = arith.constant 2.000000e+00 : f32
    %11 = vector.broadcast %cst_3 : f32 to vector<1x2048xf32>
    %12 = arith.subf %11, %10 : vector<1x2048xf32>
    %13 = arith.mulf %9, %12 : vector<1x2048xf32>
    %14 = arith.mulf %6, %13 : vector<1x2048xf32>
    %15 = arith.mulf %0, %14 : vector<1x2048xf32>
    %cst_4 = arith.constant 2.000000e+01 : f32
    %16 = vector.broadcast %cst_4 : f32 to vector<1x2048xf32>
    %17 = arith.cmpf ogt, %0, %16 : vector<1x2048xf32>
    %18 = arith.select %17, %0, %15 : vector<1x2048xi1>, vector<1x2048xf32>
    %c0_5 = arith.constant 0 : index
    %c0_6 = arith.constant 0 : index
    %19 = vector.load %arg2[%c0_5, %c0_6] : memref<1x2048xf32, #tpu.memory_space<vmem>>, vector<1x2048xf32>
    tpu.vector_store %arg2[%c0_5, %c0_6], %18 {strides = array<i32>} : memref<1x2048xf32, #tpu.memory_space<vmem>>, vector<1x2048xf32>,
    return
  }
  func.func @transform_0(%arg0: i32) -> (i32, i32) {
    %c0_i32 = arith.constant 0 : i32
    %c0_i32_0 = arith.constant 0 : i32
    return %arg0, %c0_i32 : i32, i32
  }
  func.func @transform_1(%arg0: i32) -> (i32, i32) {
    %c0_i32 = arith.constant 0 : i32
    %c0_i32_0 = arith.constant 0 : i32
    return %arg0, %c0_i32 : i32, i32
  }
}

</mosaic_0001>

<llo_original>
// kernel: _mish_impl.1
$region0: #{_mish_impl.1}
  #allocation0 [shape = 'u32[]', space=smem, size = 0x4, offset = 0x4, fixed_abs, tag = 'smem constant byte address 0x4 - core index']
  #allocation1 [shape = 'u32[72,128]{1,0:T(1,128)}', space=vmem, size = 0x9000, scoped, tag = 'internal scratch']
  %s0 = inlined_call_operand.vmem [shape: f32[1,2048], index: 0, kind: input, shape index: {}]
  %s1 = inlined_call_operand.vmem [shape: f32[1,2048], index: 1, kind: output, shape index: {}]
  %s2 = sld [smem:[#allocation0]]
  $region14: #{_mish_impl.1} parent=0
    _
  %s4 = ssub.s32 1, %s2
  %s5 = scalar_select 0, %s4, %s2
  // Predicated region
  $region2: #{_mish_impl.1} parent=0 // pred_check
    _
  $region3: #{_mish_impl.1} parent=0 // pred_check_branch
    %7 = sbr.rel (0) target = $region5
  $region4: #{_mish_impl.1} parent=0 // pred_region
    _
  $region5: #{_mish_impl.1} parent=0 // pred_fallthru
    _
  %v8 = vld [vmem:[%s0] sm:$0xff]
  %v9 = vld [vmem:[%s0 + $0x8] sm:$0xff]
  %v10 = vmin.f32 %v8, 20.0
  %v11 = vmin.f32 %v9, 20.0
  %v12 = vmul.f32 %v10, 1.442695
  %v13 = vpow.pop %v12
  %v14 = vmul.f32 %v11, 1.442695
  %v15 = vpow.pop %v14
  %v16 = vadd.f32 %v13, 2.0
  %v17 = vadd.f32 %v15, 2.0
  %v18 = vmul.f32 %v13, %v16
  %v19 = vmul.f32 %v15, %v17
  %v20 = vadd.f32 %v18, 2.0
  %v21 = vadd.f32 %v19, 2.0
  %v22 = vrcp.pop %v20
  %v23 = vrcp.pop %v21
  %v24 = vmul.f32 %v20, %v22
  %v25 = vmul.f32 %v21, %v23
  %v26 = vsub.f32 2.0, %v24
  %v27 = vsub.f32 2.0, %v25
  %v28 = vmul.f32 %v22, %v26
  %v29 = vmul.f32 %v23, %v27
  %v30 = vmul.f32 %v18, %v28
  %v31 = vmul.f32 %v19, %v29
  %v32 = vmul.f32 %v8, %v30
  %v33 = vmul.f32 %v9, %v31
  %vm34 = vcmp.gt.f32.partialorder %v8, 20.0
  %vm35 = vcmp.gt.f32.partialorder %v9, 20.0
  %v36 = vsel %vm34, %v8, %v32
  %v37 = vsel %vm35, %v9, %v33
  %38 = vst [vmem:[%s1] sm:$0xff] %v36
  %39 = vst [vmem:[%s1 + $0x8] sm:$0xff] %v37
  // Predicated region
  $region6: #{_mish_impl.1} parent=0 // pred_check
    _
  $region7: #{_mish_impl.1} parent=0 // pred_check_branch
    %41 = sbr.rel (0) target = $region9
  $region8: #{_mish_impl.1} parent=0 // pred_region
    _
  $region9: #{_mish_impl.1} parent=0 // pred_fallthru
    _
  // Predicated region
  $region10: #{_mish_impl.1} parent=0 // pred_check
    _
  $region11: #{_mish_impl.1} parent=0 // pred_check_branch
    %43 = sbr.rel (0) target = $region13
  $region12: #{_mish_impl.1} parent=0 // pred_region
    _
  $region13: #{_mish_impl.1} parent=0 // pred_fallthru
    _

</llo_original>
